<compile_context>
chip_gen: v7x
topology: tpu7x:2x2x1
jax: 0.10.0
libtpu: 0.0.40
codegen_flags: <defaults>
</compile_context>

<pallas_src>
import functools

import jax
import jax.numpy as jnp
from jax.experimental import pallas as pl
from jax.experimental.pallas import tpu as pltpu


def _gather_accumulate(idx_ref, table_ref, mask_ref, b, S, V):
    """sum_s w[b,s] * table[idx[b,s], :] for one batch row, exact fp32.

    idx_ref / mask_ref are SMEM refs (scalar reads); table_ref is a VMEM ref
    of shape (V, Dp) with Dp a multiple of 128 lanes.
    """
    Dp = table_ref.shape[1]
    acc = jnp.zeros((1, Dp), jnp.float32)
    denom = jnp.float32(0.0)
    for s in range(S):  # S is a compile-time constant -> fully unrolled
        i = idx_ref[b, s]
        # TODO(synk): nn.Embedding raises on out-of-range indices; we clamp to
        # avoid an unchecked OOB VMEM read instead.
        i = jnp.clip(i, 0, V - 1)
        row = table_ref[pl.ds(i, 1), :]  # (1, Dp) dynamic row gather from VMEM
        if mask_ref is None:
            acc = acc + row
        else:
            m = mask_ref[b, s]           # f32 scalar from SMEM
            acc = acc + m * row
            denom = denom + m
    return acc, denom


def _masked_kernel(idx_ref, mask_ref, table_ref, out_ref):
    B, S = idx_ref.shape
    V = table_ref.shape[0]
    rows = []
    for b in range(B):  # B is a compile-time constant -> fully unrolled
        acc, denom = _gather_accumulate(idx_ref, table_ref, mask_ref, b, S, V)
        rows.append(acc / (denom + jnp.float32(1e-9)))   # exact fp32 divide
    out_ref[...] = jnp.concatenate(rows, axis=0)
    # TODO(synk): nn.Dropout is identity in eval mode; training-mode dropout
    # would use pltpu.prng_seed + pltpu.stateful_bernoulli here.


def _unmasked_kernel(idx_ref, table_ref, out_ref, *, inv_len):
    B, S = idx_ref.shape
    V = table_ref.shape[0]
    rows = []
    for b in range(B):
        acc, _ = _gather_accumulate(idx_ref, table_ref, None, b, S, V)
        rows.append(acc * jnp.float32(inv_len))          # exact mean (1/S exact for S=8)
    out_ref[...] = jnp.concatenate(rows, axis=0)


def mutation_embedding(x_idx, mask, table):
    """x_idx: (B, S) int, mask: (B, S) float/bool or None, table: (V, D) float32
    -> (B, D) float32."""
    B, S = x_idx.shape
    V, D = table.shape

    LANE = 128
    Dp = pl.cdiv(D, LANE) * LANE
    table_f32 = table.astype(jnp.float32)
    if Dp != D:
        # Zero-pad embed_dim up to a lane-dense width; sliced back below.
        table_f32 = jnp.pad(table_f32, ((0, 0), (0, Dp - D)))
    x_idx = x_idx.astype(jnp.int32)

    smem = pl.BlockSpec(memory_space=pltpu.MemorySpace.SMEM)
    vmem = pl.BlockSpec(memory_space=pltpu.MemorySpace.VMEM)

    if mask is None:
        kernel = functools.partial(_unmasked_kernel, inv_len=1.0 / S)
        args = (x_idx, table_f32)
        in_specs = [smem, vmem]
    else:
        kernel = _masked_kernel
        args = (x_idx, mask.astype(jnp.float32), table_f32)
        in_specs = [smem, smem, vmem]

    cost = pl.CostEstimate(
        flops=2 * B * S * Dp + 2 * B * Dp,          # gather-FMAs + normalization
        transcendentals=0,
        bytes_accessed=4 * (V * Dp + 2 * B * S + B * Dp),
    )

    out = pl.pallas_call(
        kernel,
        out_shape=jax.ShapeDtypeStruct((B, Dp), jnp.float32),
        # Grid-less: whole arrays resident on-chip, no pipeline bookkeeping.
        in_specs=in_specs,
        out_specs=vmem,
        cost_estimate=cost,
    )(*args)
    return out[:, :D]


if __name__ == "__main__":
    key = jax.random.PRNGKey(0)
    k_tab, k_idx, k_mask = jax.random.split(key, 3)

    # Module config (small, synthetic): num_mutations = 8, embed_dim = 32, batch = 2.
    num_mutations = 8
    embed_dim = 32
    batch = 2

    # Deterministic parameter init (nn.Embedding weight ~ N(0, 1)).
    table = jax.random.normal(k_tab, (num_mutations, embed_dim), dtype=jnp.float32)

    # Inputs: mutation indices (B, S=num_mutations) and boolean mask.
    x_idx = jax.random.randint(
        k_idx, (batch, num_mutations), 0, num_mutations, dtype=jnp.int32
    )
    mask_bool = jax.random.bernoulli(k_mask, 0.7, (batch, num_mutations))
    mask = mask_bool.astype(jnp.float32)

    # --- masked path ---
    out = mutation_embedding(x_idx, mask, table)
    out = jax.block_until_ready(out)

    # Pure-JAX fp32 reference; kernel is exact fp32 now, tight tolerance.
    emb = table[x_idx] * mask[..., None]
    ref = emb.sum(axis=1) / (mask.sum(axis=1, keepdims=True) + 1e-9)
    assert out.shape == (batch, embed_dim)
    assert jnp.allclose(out, ref, atol=1e-5, rtol=1e-5)

    # --- mask=None path (exact mean over the sequence) ---
    out_none = mutation_embedding(x_idx, None, table)
    out_none = jax.block_until_ready(out_none)
    ref_none = table[x_idx].mean(axis=1)
    assert jnp.allclose(out_none, ref_none, atol=1e-5, rtol=1e-5)

    print("KERNEL_OK")
</pallas_src>

<mosaic_0001>
module attributes {stable_mosaic.version = 11 : i64} {
  func.func @_masked_kernel(%arg0: memref<2x8xi32, #tpu.memory_space<smem>>, %arg1: memref<2x8xf32, #tpu.memory_space<smem>>, %arg2: memref<8x128xf32, #tpu.memory_space<vmem>>, %arg3: memref<2x128xf32, #tpu.memory_space<vmem>>) attributes {dimension_semantics = [], scalar_prefetch = 0 : i64, scratch_operands = 0 : i64, tpu.core_type = #tpu.core_type<tc>} {
    %cst = arith.constant 0.000000e+00 : f32
    %0 = vector.broadcast %cst : f32 to vector<1x128xf32>
    %c0 = arith.constant 0 : index
    %c0_0 = arith.constant 0 : index
    %1 = memref.load %arg0[%c0, %c0_0] : memref<2x8xi32, #tpu.memory_space<smem>>
    %c0_i32 = arith.constant 0 : i32
    %c7_i32 = arith.constant 7 : i32
    %2 = arith.maxsi %c0_i32, %1 : i32
    %3 = arith.minsi %c7_i32, %2 : i32
    %4 = arith.index_cast %3 : i32 to index
    %c0_1 = arith.constant 0 : index
    %5 = vector.load %arg2[%4, %c0_1] : memref<8x128xf32, #tpu.memory_space<vmem>>, vector<1x128xf32>
    %c0_2 = arith.constant 0 : index
    %c0_3 = arith.constant 0 : index
    %6 = memref.load %arg1[%c0_2, %c0_3] : memref<2x8xf32, #tpu.memory_space<smem>>
    %7 = vector.broadcast %6 : f32 to vector<1x128xf32>
    %8 = arith.mulf %7, %5 : vector<1x128xf32>
    %9 = arith.addf %0, %8 : vector<1x128xf32>
    %cst_4 = arith.constant 0.000000e+00 : f32
    %10 = arith.addf %cst_4, %6 : f32
    %c0_5 = arith.constant 0 : index
    %c1 = arith.constant 1 : index
    %11 = memref.load %arg0[%c0_5, %c1] : memref<2x8xi32, #tpu.memory_space<smem>>
    %c0_i32_6 = arith.constant 0 : i32
    %c7_i32_7 = arith.constant 7 : i32
    %12 = arith.maxsi %c0_i32_6, %11 : i32
    %13 = arith.minsi %c7_i32_7, %12 : i32
    %14 = arith.index_cast %13 : i32 to index
    %c0_8 = arith.constant 0 : index
    %15 = vector.load %arg2[%14, %c0_8] : memref<8x128xf32, #tpu.memory_space<vmem>>, vector<1x128xf32>
    %c0_9 = arith.constant 0 : index
    %c1_10 = arith.constant 1 : index
    %16 = memref.load %arg1[%c0_9, %c1_10] : memref<2x8xf32, #tpu.memory_space<smem>>
    %17 = vector.broadcast %16 : f32 to vector<1x128xf32>
    %18 = arith.mulf %17, %15 : vector<1x128xf32>
    %19 = arith.addf %9, %18 : vector<1x128xf32>
    %20 = arith.addf %10, %16 : f32
    %c0_11 = arith.constant 0 : index
    %c2 = arith.constant 2 : index
    %21 = memref.load %arg0[%c0_11, %c2] : memref<2x8xi32, #tpu.memory_space<smem>>
    %c0_i32_12 = arith.constant 0 : i32
    %c7_i32_13 = arith.constant 7 : i32
    %22 = arith.maxsi %c0_i32_12, %21 : i32
    %23 = arith.minsi %c7_i32_13, %22 : i32
    %24 = arith.index_cast %23 : i32 to index
    %c0_14 = arith.constant 0 : index
    %25 = vector.load %arg2[%24, %c0_14] : memref<8x128xf32, #tpu.memory_space<vmem>>, vector<1x128xf32>
    %c0_15 = arith.constant 0 : index
    %c2_16 = arith.constant 2 : index
    %26 = memref.load %arg1[%c0_15, %c2_16] : memref<2x8xf32, #tpu.memory_space<smem>>
    %27 = vector.broadcast %26 : f32 to vector<1x128xf32>
    %28 = arith.mulf %27, %25 : vector<1x128xf32>
    %29 = arith.addf %19, %28 : vector<1x128xf32>
    %30 = arith.addf %20, %26 : f32
    %c0_17 = arith.constant 0 : index
    %c3 = arith.constant 3 : index
    %31 = memref.load %arg0[%c0_17, %c3] : memref<2x8xi32, #tpu.memory_space<smem>>
    %c0_i32_18 = arith.constant 0 : i32
    %c7_i32_19 = arith.constant 7 : i32
    %32 = arith.maxsi %c0_i32_18, %31 : i32
    %33 = arith.minsi %c7_i32_19, %32 : i32
    %34 = arith.index_cast %33 : i32 to index
    %c0_20 = arith.constant 0 : index
    %35 = vector.load %arg2[%34, %c0_20] : memref<8x128xf32, #tpu.memory_space<vmem>>, vector<1x128xf32>
    %c0_21 = arith.constant 0 : index
    %c3_22 = arith.constant 3 : index
    %36 = memref.load %arg1[%c0_21, %c3_22] : memref<2x8xf32, #tpu.memory_space<smem>>
    %37 = vector.broadcast %36 : f32 to vector<1x128xf32>
    %38 = arith.mulf %37, %35 : vector<1x128xf32>
    %39 = arith.addf %29, %38 : vector<1x128xf32>
    %40 = arith.addf %30, %36 : f32
    %c0_23 = arith.constant 0 : index
    %c4 = arith.constant 4 : index
    %41 = memref.load %arg0[%c0_23, %c4] : memref<2x8xi32, #tpu.memory_space<smem>>
    %c0_i32_24 = arith.constant 0 : i32
    %c7_i32_25 = arith.constant 7 : i32
    %42 = arith.maxsi %c0_i32_24, %41 : i32
    %43 = arith.minsi %c7_i32_25, %42 : i32
    %44 = arith.index_cast %43 : i32 to index
    %c0_26 = arith.constant 0 : index
    %45 = vector.load %arg2[%44, %c0_26] : memref<8x128xf32, #tpu.memory_space<vmem>>, vector<1x128xf32>
    %c0_27 = arith.constant 0 : index
    %c4_28 = arith.constant 4 : index
    %46 = memref.load %arg1[%c0_27, %c4_28] : memref<2x8xf32, #tpu.memory_space<smem>>
    %47 = vector.broadcast %46 : f32 to vector<1x128xf32>
    %48 = arith.mulf %47, %45 : vector<1x128xf32>
    %49 = arith.addf %39, %48 : vector<1x128xf32>
    %50 = arith.addf %40, %46 : f32
    %c0_29 = arith.constant 0 : index
    %c5 = arith.constant 5 : index
    %51 = memref.load %arg0[%c0_29, %c5] : memref<2x8xi32, #tpu.memory_space<smem>>
    %c0_i32_30 = arith.constant 0 : i32
    %c7_i32_31 = arith.constant 7 : i32
    %52 = arith.maxsi %c0_i32_30, %51 : i32
    %53 = arith.minsi %c7_i32_31, %52 : i32
    %54 = arith.index_cast %53 : i32 to index
    %c0_32 = arith.constant 0 : index
    %55 = vector.load %arg2[%54, %c0_32] : memref<8x128xf32, #tpu.memory_space<vmem>>, vector<1x128xf32>
    %c0_33 = arith.constant 0 : index
    %c5_34 = arith.constant 5 : index
    %56 = memref.load %arg1[%c0_33, %c5_34] : memref<2x8xf32, #tpu.memory_space<smem>>
    %57 = vector.broadcast %56 : f32 to vector<1x128xf32>
    %58 = arith.mulf %57, %55 : vector<1x128xf32>
    %59 = arith.addf %49, %58 : vector<1x128xf32>
    %60 = arith.addf %50, %56 : f32
    %c0_35 = arith.constant 0 : index
    %c6 = arith.constant 6 : index
    %61 = memref.load %arg0[%c0_35, %c6] : memref<2x8xi32, #tpu.memory_space<smem>>
    %c0_i32_36 = arith.constant 0 : i32
    %c7_i32_37 = arith.constant 7 : i32
    %62 = arith.maxsi %c0_i32_36, %61 : i32
    %63 = arith.minsi %c7_i32_37, %62 : i32
    %64 = arith.index_cast %63 : i32 to index
    %c0_38 = arith.constant 0 : index
    %65 = vector.load %arg2[%64, %c0_38] : memref<8x128xf32, #tpu.memory_space<vmem>>, vector<1x128xf32>
    %c0_39 = arith.constant 0 : index
    %c6_40 = arith.constant 6 : index
    %66 = memref.load %arg1[%c0_39, %c6_40] : memref<2x8xf32, #tpu.memory_space<smem>>
    %67 = vector.broadcast %66 : f32 to vector<1x128xf32>
    %68 = arith.mulf %67, %65 : vector<1x128xf32>
    %69 = arith.addf %59, %68 : vector<1x128xf32>
    %70 = arith.addf %60, %66 : f32
    %c0_41 = arith.constant 0 : index
    %c7 = arith.constant 7 : index
    %71 = memref.load %arg0[%c0_41, %c7] : memref<2x8xi32, #tpu.memory_space<smem>>
    %c0_i32_42 = arith.constant 0 : i32
    %c7_i32_43 = arith.constant 7 : i32
    %72 = arith.maxsi %c0_i32_42, %71 : i32
    %73 = arith.minsi %c7_i32_43, %72 : i32
    %74 = arith.index_cast %73 : i32 to index
    %c0_44 = arith.constant 0 : index
    %75 = vector.load %arg2[%74, %c0_44] : memref<8x128xf32, #tpu.memory_space<vmem>>, vector<1x128xf32>
    %c0_45 = arith.constant 0 : index
    %c7_46 = arith.constant 7 : index
    %76 = memref.load %arg1[%c0_45, %c7_46] : memref<2x8xf32, #tpu.memory_space<smem>>
    %77 = vector.broadcast %76 : f32 to vector<1x128xf32>
    %78 = arith.mulf %77, %75 : vector<1x128xf32>
    %79 = arith.addf %69, %78 : vector<1x128xf32>
    %80 = arith.addf %70, %76 : f32
    %cst_47 = arith.constant 9.99999971E-10 : f32
    %81 = arith.addf %80, %cst_47 : f32
    %82 = vector.broadcast %81 : f32 to vector<1x128xf32>
    %83 = arith.divf %79, %82 : vector<1x128xf32>
    %cst_48 = arith.constant 0.000000e+00 : f32
    %84 = vector.broadcast %cst_48 : f32 to vector<1x128xf32>
    %c1_49 = arith.constant 1 : index
    %c0_50 = arith.constant 0 : index
    %85 = memref.load %arg0[%c1_49, %c0_50] : memref<2x8xi32, #tpu.memory_space<smem>>
    %c0_i32_51 = arith.constant 0 : i32
    %c7_i32_52 = arith.constant 7 : i32
    %86 = arith.maxsi %c0_i32_51, %85 : i32
    %87 = arith.minsi %c7_i32_52, %86 : i32
    %88 = arith.index_cast %87 : i32 to index
    %c0_53 = arith.constant 0 : index
    %89 = vector.load %arg2[%88, %c0_53] : memref<8x128xf32, #tpu.memory_space<vmem>>, vector<1x128xf32>
    %c1_54 = arith.constant 1 : index
    %c0_55 = arith.constant 0 : index
    %90 = memref.load %arg1[%c1_54, %c0_55] : memref<2x8xf32, #tpu.memory_space<smem>>
    %91 = vector.broadcast %90 : f32 to vector<1x128xf32>
    %92 = arith.mulf %91, %89 : vector<1x128xf32>
    %93 = arith.addf %84, %92 : vector<1x128xf32>
    %cst_56 = arith.constant 0.000000e+00 : f32
    %94 = arith.addf %cst_56, %90 : f32
    %c1_57 = arith.constant 1 : index
    %c1_58 = arith.constant 1 : index
    %95 = memref.load %arg0[%c1_57, %c1_58] : memref<2x8xi32, #tpu.memory_space<smem>>
    %c0_i32_59 = arith.constant 0 : i32
    %c7_i32_60 = arith.constant 7 : i32
    %96 = arith.maxsi %c0_i32_59, %95 : i32
    %97 = arith.minsi %c7_i32_60, %96 : i32
    %98 = arith.index_cast %97 : i32 to index
    %c0_61 = arith.constant 0 : index
    %99 = vector.load %arg2[%98, %c0_61] : memref<8x128xf32, #tpu.memory_space<vmem>>, vector<1x128xf32>
    %c1_62 = arith.constant 1 : index
    %c1_63 = arith.constant 1 : index
    %100 = memref.load %arg1[%c1_62, %c1_63] : memref<2x8xf32, #tpu.memory_space<smem>>
    %101 = vector.broadcast %100 : f32 to vector<1x128xf32>
    %102 = arith.mulf %101, %99 : vector<1x128xf32>
    %103 = arith.addf %93, %102 : vector<1x128xf32>
    %104 = arith.addf %94, %100 : f32
    %c1_64 = arith.constant 1 : index
    %c2_65 = arith.constant 2 : index
    %105 = memref.load %arg0[%c1_64, %c2_65] : memref<2x8xi32, #tpu.memory_space<smem>>
    %c0_i32_66 = arith.constant 0 : i32
    %c7_i32_67 = arith.constant 7 : i32
    %106 = arith.maxsi %c0_i32_66, %105 : i32
    %107 = arith.minsi %c7_i32_67, %106 : i32
    %108 = arith.index_cast %107 : i32 to index
    %c0_68 = arith.constant 0 : index
    %109 = vector.load %arg2[%108, %c0_68] : memref<8x128xf32, #tpu.memory_space<vmem>>, vector<1x128xf32>
    %c1_69 = arith.constant 1 : index
    %c2_70 = arith.constant 2 : index
    %110 = memref.load %arg1[%c1_69, %c2_70] : memref<2x8xf32, #tpu.memory_space<smem>>
    %111 = vector.broadcast %110 : f32 to vector<1x128xf32>
    %112 = arith.mulf %111, %109 : vector<1x128xf32>
    %113 = arith.addf %103, %112 : vector<1x128xf32>
    %114 = arith.addf %104, %110 : f32
    %c1_71 = arith.constant 1 : index
    %c3_72 = arith.constant 3 : index
    %115 = memref.load %arg0[%c1_71, %c3_72] : memref<2x8xi32, #tpu.memory_space<smem>>
    %c0_i32_73 = arith.constant 0 : i32
    %c7_i32_74 = arith.constant 7 : i32
    %116 = arith.maxsi %c0_i32_73, %115 : i32
    %117 = arith.minsi %c7_i32_74, %116 : i32
    %118 = arith.index_cast %117 : i32 to index
    %c0_75 = arith.constant 0 : index
    %119 = vector.load %arg2[%118, %c0_75] : memref<8x128xf32, #tpu.memory_space<vmem>>, vector<1x128xf32>
    %c1_76 = arith.constant 1 : index
    %c3_77 = arith.constant 3 : index
    %120 = memref.load %arg1[%c1_76, %c3_77] : memref<2x8xf32, #tpu.memory_space<smem>>
    %121 = vector.broadcast %120 : f32 to vector<1x128xf32>
    %122 = arith.mulf %121, %119 : vector<1x128xf32>
    %123 = arith.addf %113, %122 : vector<1x128xf32>
    %124 = arith.addf %114, %120 : f32
    %c1_78 = arith.constant 1 : index
    %c4_79 = arith.constant 4 : index
    %125 = memref.load %arg0[%c1_78, %c4_79] : memref<2x8xi32, #tpu.memory_space<smem>>
    %c0_i32_80 = arith.constant 0 : i32
    %c7_i32_81 = arith.constant 7 : i32
    %126 = arith.maxsi %c0_i32_80, %125 : i32
    %127 = arith.minsi %c7_i32_81, %126 : i32
    %128 = arith.index_cast %127 : i32 to index
    %c0_82 = arith.constant 0 : index
    %129 = vector.load %arg2[%128, %c0_82] : memref<8x128xf32, #tpu.memory_space<vmem>>, vector<1x128xf32>
    %c1_83 = arith.constant 1 : index
    %c4_84 = arith.constant 4 : index
    %130 = memref.load %arg1[%c1_83, %c4_84] : memref<2x8xf32, #tpu.memory_space<smem>>
    %131 = vector.broadcast %130 : f32 to vector<1x128xf32>
    %132 = arith.mulf %131, %129 : vector<1x128xf32>
    %133 = arith.addf %123, %132 : vector<1x128xf32>
    %134 = arith.addf %124, %130 : f32
    %c1_85 = arith.constant 1 : index
    %c5_86 = arith.constant 5 : index
    %135 = memref.load %arg0[%c1_85, %c5_86] : memref<2x8xi32, #tpu.memory_space<smem>>
    %c0_i32_87 = arith.constant 0 : i32
    %c7_i32_88 = arith.constant 7 : i32
    %136 = arith.maxsi %c0_i32_87, %135 : i32
    %137 = arith.minsi %c7_i32_88, %136 : i32
    %138 = arith.index_cast %137 : i32 to index
    %c0_89 = arith.constant 0 : index
    %139 = vector.load %arg2[%138, %c0_89] : memref<8x128xf32, #tpu.memory_space<vmem>>, vector<1x128xf32>
    %c1_90 = arith.constant 1 : index
    %c5_91 = arith.constant 5 : index
    %140 = memref.load %arg1[%c1_90, %c5_91] : memref<2x8xf32, #tpu.memory_space<smem>>
    %141 = vector.broadcast %140 : f32 to vector<1x128xf32>
    %142 = arith.mulf %141, %139 : vector<1x128xf32>
    %143 = arith.addf %133, %142 : vector<1x128xf32>
    %144 = arith.addf %134, %140 : f32
    %c1_92 = arith.constant 1 : index
    %c6_93 = arith.constant 6 : index
    %145 = memref.load %arg0[%c1_92, %c6_93] : memref<2x8xi32, #tpu.memory_space<smem>>
    %c0_i32_94 = arith.constant 0 : i32
    %c7_i32_95 = arith.constant 7 : i32
    %146 = arith.maxsi %c0_i32_94, %145 : i32
    %147 = arith.minsi %c7_i32_95, %146 : i32
    %148 = arith.index_cast %147 : i32 to index
    %c0_96 = arith.constant 0 : index
    %149 = vector.load %arg2[%148, %c0_96] : memref<8x128xf32, #tpu.memory_space<vmem>>, vector<1x128xf32>
    %c1_97 = arith.constant 1 : index
    %c6_98 = arith.constant 6 : index
    %150 = memref.load %arg1[%c1_97, %c6_98] : memref<2x8xf32, #tpu.memory_space<smem>>
    %151 = vector.broadcast %150 : f32 to vector<1x128xf32>
    %152 = arith.mulf %151, %149 : vector<1x128xf32>
    %153 = arith.addf %143, %152 : vector<1x128xf32>
    %154 = arith.addf %144, %150 : f32
    %c1_99 = arith.constant 1 : index
    %c7_100 = arith.constant 7 : index
    %155 = memref.load %arg0[%c1_99, %c7_100] : memref<2x8xi32, #tpu.memory_space<smem>>
    %c0_i32_101 = arith.constant 0 : i32
    %c7_i32_102 = arith.constant 7 : i32
    %156 = arith.maxsi %c0_i32_101, %155 : i32
    %157 = arith.minsi %c7_i32_102, %156 : i32
    %158 = arith.index_cast %157 : i32 to index
    %c0_103 = arith.constant 0 : index
    %159 = vector.load %arg2[%158, %c0_103] : memref<8x128xf32, #tpu.memory_space<vmem>>, vector<1x128xf32>
    %c1_104 = arith.constant 1 : index
    %c7_105 = arith.constant 7 : index
    %160 = memref.load %arg1[%c1_104, %c7_105] : memref<2x8xf32, #tpu.memory_space<smem>>
    %161 = vector.broadcast %160 : f32 to vector<1x128xf32>
    %162 = arith.mulf %161, %159 : vector<1x128xf32>
    %163 = arith.addf %153, %162 : vector<1x128xf32>
    %164 = arith.addf %154, %160 : f32
    %cst_106 = arith.constant 9.99999971E-10 : f32
    %165 = arith.addf %164, %cst_106 : f32
    %166 = vector.broadcast %165 : f32 to vector<1x128xf32>
    %167 = arith.divf %163, %166 : vector<1x128xf32>
    %168 = tpu.concatenate %83, %167 in 0 : vector<1x128xf32>, vector<1x128xf32> -> vector<2x128xf32>
    %c0_107 = arith.constant 0 : index
    %c0_108 = arith.constant 0 : index
    %169 = vector.load %arg3[%c0_107, %c0_108] : memref<2x128xf32, #tpu.memory_space<vmem>>, vector<2x128xf32>
    tpu.vector_store %arg3[%c0_107, %c0_108], %168 {strides = array<i32>} : memref<2x128xf32, #tpu.memory_space<vmem>>, vector<2x128xf32>,
    return
  }
}

</mosaic_0001>

<llo_original>
// kernel: tpu_custom_call.1
$region0: #{tpu_custom_call.1}
  #allocation0 [shape = 'u32[]', space=smem, size = 0x4, offset = 0x4, fixed_abs, tag = 'smem constant byte address 0x4 - core index']
  #allocation1 [shape = 'u32[144,128]{1,0:T(1,128)}', space=vmem, size = 0x12000, scoped, tag = 'internal scratch']
  %s0 = inlined_call_operand.hbm [shape: s32[2,8], index: 0, kind: input, shape index: {}]
  %s1 = inlined_call_operand.vmem [shape: f32[2,8], index: 1, kind: input, shape index: {}]
  %s2 = inlined_call_operand.hbm [shape: f32[8,128], index: 2, kind: input, shape index: {}]
  %s3 = inlined_call_operand.hbm [shape: f32[2,128], index: 3, kind: output, shape index: {}]
  %s4 = sld [smem:[#allocation0]]
  $region34: #{tpu_custom_call.1} parent=0
    _
  %s6 = ssub.s32 1, %s4
  %s7 = scalar_select 0, %s6, %s4
  $region1: #{tpu_custom_call.1} parent=0
    #allocation2 [shape = 'u8[1024]{0}', space=smem, size = 0x400, scoped, tag = 'input window, operand 0, single buffered']
    #allocation3 [shape = 's32[1]{0}', space=sflag, size = 0x4, scoped, tag = 'scoped memory for tpu_custom_call.1']
    #allocation4 [shape = 's32[1]{0}', space=sflag, size = 0x4, scoped, tag = 'scoped memory for tpu_custom_call.1']
    #allocation5 [shape = 's32[1]{0}', space=sflag, size = 0x4, scoped, tag = 'scoped memory for tpu_custom_call.1']
    #allocation6 [shape = 's32[1]{0}', space=sflag, size = 0x4, scoped, tag = 'scoped memory for tpu_custom_call.1']
    #allocation7 [shape = 'u8[1024]{0}', space=smem, size = 0x400, scoped, tag = 'input window, operand 1, single buffered']
    #allocation8 [shape = 'u8[4096]{0}', space=vmem, size = 0x1000, scoped, tag = 'input window, operand 2, single buffered']
    #allocation9 [shape = 'u8[1024]{0}', space=vmem, size = 0x400, scoped, tag = 'output window, operand 0, single buffered']
    %8 = vsyncpa [#allocation5], 0
    %9 = vsyncpa [#allocation6], 0
    %10 = vsyncpa [#allocation3], 0
    %11 = vsyncpa [#allocation4], 0
    // Predicated region
    $region2: #{tpu_custom_call.1} parent=1 // pred_check
      _
    $region3: #{tpu_custom_call.1} parent=1 // pred_check_branch
      %13 = sbr.rel (0) target = $region5
    $region4: #{tpu_custom_call.1} parent=1 // pred_region
      %s15 = ssub.s32 32, 32
      %16 = vsyncadd [#allocation5], %s15
      %19 = dma.hbm_to_smem %s0, 32, [#allocation2], [#allocation5]
    $region5: #{tpu_custom_call.1} parent=1 // pred_fallthru
      _
    // Predicated region
    $region6: #{tpu_custom_call.1} parent=1 // pred_check
      _
    $region7: #{tpu_custom_call.1} parent=1 // pred_check_branch
      %21 = sbr.rel (0) target = $region9
    $region8: #{tpu_custom_call.1} parent=1 // pred_region
      %s23 = ssub.s32 32, 32
      %24 = vsyncadd [#allocation6], %s23
      %s26 = sshll.u32 %s1, 4
      %s27 = int_to_ptr.vmem [resolvable:$true] %s26
      %29 = dma.vmem_to_smem %s27, 32, [#allocation7], [#allocation6]
    $region9: #{tpu_custom_call.1} parent=1 // pred_fallthru
      _
    // Predicated region
    $region10: #{tpu_custom_call.1} parent=1 // pred_check
      _
    $region11: #{tpu_custom_call.1} parent=1 // pred_check_branch
      %31 = sbr.rel (0) target = $region13
    $region12: #{tpu_custom_call.1} parent=1 // pred_region
      %s33 = ssub.s32 128, 128
      %34 = vsyncadd [#allocation3], %s33
      %s36 = sshll.u32 [#allocation8], 4
      %s37 = int_to_ptr.vmem [resolvable:$true] %s36
      %39 = dma.hbm_to_vmem [thread:$0]  %s2, 128, %s37, [#allocation3]
    $region13: #{tpu_custom_call.1} parent=1 // pred_fallthru
      _
    // Predicated region
    $region14: #{tpu_custom_call.1} parent=1 // pred_check
      _
    $region15: #{tpu_custom_call.1} parent=1 // pred_check_branch
      %41 = sbr.rel (0) target = $region17
    $region16: #{tpu_custom_call.1} parent=1 // pred_region
      %42 = dma.done [#allocation5], 32
    $region17: #{tpu_custom_call.1} parent=1 // pred_fallthru
      _
    // Predicated region
    $region18: #{tpu_custom_call.1} parent=1 // pred_check
      _
    $region19: #{tpu_custom_call.1} parent=1 // pred_check_branch
      %44 = sbr.rel (0) target = $region21
    $region20: #{tpu_custom_call.1} parent=1 // pred_region
      %45 = dma.done [#allocation6], 32
    $region21: #{tpu_custom_call.1} parent=1 // pred_fallthru
      _
    // Predicated region
    $region22: #{tpu_custom_call.1} parent=1 // pred_check
      _
    $region23: #{tpu_custom_call.1} parent=1 // pred_check_branch
      %47 = sbr.rel (0) target = $region25
    $region24: #{tpu_custom_call.1} parent=1 // pred_region
      %48 = dma.done [#allocation3], 128
    $region25: #{tpu_custom_call.1} parent=1 // pred_fallthru
      _
    %49 = sfence
    %s50 = sld [smem:[#allocation2]]
    %p51 = scmp.gt.s32.totalorder %s50, 0
    %s52 = scalar_select %p51, %s50, 0
    %p53 = scmp.lt.s32.totalorder %s52, 7
    %s54 = scalar_select %p53, %s52, 7
    %s55 = scalar_lea.vmem [#allocation8], %s54
    %v56 = vld [vmem:[%s55] sm:$0x1]
    %s57 = sld [smem:[#allocation7]]
    %v58 = vstv %s57
    %v59 = vmul.f32 %v58, %v56
    %v60 = vadd.f32 %v59, 0.0
    %s61 = sadd.f32 %s57, 0.0
    %s62 = sld [smem:[#allocation2 + $0x1]]
    %p63 = scmp.gt.s32.totalorder %s62, 0
    %s64 = scalar_select %p63, %s62, 0
    %p65 = scmp.lt.s32.totalorder %s64, 7
    %s66 = scalar_select %p65, %s64, 7
    %s67 = scalar_lea.vmem [#allocation8], %s66
    %v68 = vld [vmem:[%s67] sm:$0x1]
    %s69 = sld [smem:[#allocation7 + $0x1]]
    %v70 = vstv %s69
    %v71 = vmul.f32 %v70, %v68
    %v72 = vadd.f32 %v60, %v71
    %s73 = sadd.f32 %s61, %s69
    %s74 = sld [smem:[#allocation2 + $0x2]]
    %p75 = scmp.gt.s32.totalorder %s74, 0
    %s76 = scalar_select %p75, %s74, 0
    %p77 = scmp.lt.s32.totalorder %s76, 7
    %s78 = scalar_select %p77, %s76, 7
    %s79 = scalar_lea.vmem [#allocation8], %s78
    %v80 = vld [vmem:[%s79] sm:$0x1]
    %s81 = sld [smem:[#allocation7 + $0x2]]
    %v82 = vstv %s81
    %v83 = vmul.f32 %v82, %v80
    %v84 = vadd.f32 %v72, %v83
    %s85 = sadd.f32 %s73, %s81
    %s86 = sld [smem:[#allocation2 + $0x3]]
    %p87 = scmp.gt.s32.totalorder %s86, 0
    %s88 = scalar_select %p87, %s86, 0
    %p89 = scmp.lt.s32.totalorder %s88, 7
    %s90 = scalar_select %p89, %s88, 7
    %s91 = scalar_lea.vmem [#allocation8], %s90
    %v92 = vld [vmem:[%s91] sm:$0x1]
    %s93 = sld [smem:[#allocation7 + $0x3]]
    %v94 = vstv %s93
    %v95 = vmul.f32 %v94, %v92
    %v96 = vadd.f32 %v84, %v95
    %s97 = sadd.f32 %s85, %s93
    %s98 = sld [smem:[#allocation2 + $0x4]]
    %p99 = scmp.gt.s32.totalorder %s98, 0
    %s100 = scalar_select %p99, %s98, 0
    %p101 = scmp.lt.s32.totalorder %s100, 7
    %s102 = scalar_select %p101, %s100, 7
    %s103 = scalar_lea.vmem [#allocation8], %s102
    %v104 = vld [vmem:[%s103] sm:$0x1]
    %s105 = sld [smem:[#allocation7 + $0x4]]
    %v106 = vstv %s105
    %v107 = vmul.f32 %v106, %v104
    %v108 = vadd.f32 %v96, %v107
    %s109 = sadd.f32 %s97, %s105
    %s110 = sld [smem:[#allocation2 + $0x5]]
    %p111 = scmp.gt.s32.totalorder %s110, 0
    %s112 = scalar_select %p111, %s110, 0
    %p113 = scmp.lt.s32.totalorder %s112, 7
    %s114 = scalar_select %p113, %s112, 7
    %s115 = scalar_lea.vmem [#allocation8], %s114
    %v116 = vld [vmem:[%s115] sm:$0x1]
    %s117 = sld [smem:[#allocation7 + $0x5]]
    %v118 = vstv %s117
    %v119 = vmul.f32 %v118, %v116
    %v120 = vadd.f32 %v108, %v119
    %s121 = sadd.f32 %s109, %s117
    %s122 = sld [smem:[#allocation2 + $0x6]]
    %p123 = scmp.gt.s32.totalorder %s122, 0
    %s124 = scalar_select %p123, %s122, 0
    %p125 = scmp.lt.s32.totalorder %s124, 7
    %s126 = scalar_select %p125, %s124, 7
    %s127 = scalar_lea.vmem [#allocation8], %s126
    %v128 = vld [vmem:[%s127] sm:$0x1]
    %s129 = sld [smem:[#allocation7 + $0x6]]
    %v130 = vstv %s129
    %v131 = vmul.f32 %v130, %v128
    %v132 = vadd.f32 %v120, %v131
    %s133 = sadd.f32 %s121, %s129
    %s134 = sld [smem:[#allocation2 + $0x7]]
    %p135 = scmp.gt.s32.totalorder %s134, 0
    %s136 = scalar_select %p135, %s134, 0
    %p137 = scmp.lt.s32.totalorder %s136, 7
    %s138 = scalar_select %p137, %s136, 7
    %s139 = scalar_lea.vmem [#allocation8], %s138
    %v140 = vld [vmem:[%s139] sm:$0x1]
    %s141 = sld [smem:[#allocation7 + $0x7]]
    %v142 = vstv %s141
    %v143 = vmul.f32 %v142, %v140
    %v144 = vadd.f32 %v132, %v143
    %s145 = sadd.f32 %s133, %s141
    %s146 = sadd.f32 %s145, 1e-09
    %v147 = vstv %s146
    %v148 = vrcp.pop %v147
    %v149 = vmul.f32 %v144, %v148
    %s150 = sld [smem:[#allocation2 + $0x80]]
    %p151 = scmp.gt.s32.totalorder %s150, 0
    %s152 = scalar_select %p151, %s150, 0
    %p153 = scmp.lt.s32.totalorder %s152, 7
    %s154 = scalar_select %p153, %s152, 7
    %s155 = scalar_lea.vmem [#allocation8], %s154
    %v156 = vld [vmem:[%s155] sm:$0x1]
    %s157 = sld [smem:[#allocation7 + $0x80]]
    %v158 = vstv %s157
    %v159 = vmul.f32 %v158, %v156
    %v160 = vadd.f32 %v159, 0.0
    %s161 = sadd.f32 %s157, 0.0
    %s162 = sld [smem:[#allocation2 + $0x81]]
    %p163 = scmp.gt.s32.totalorder %s162, 0
    %s164 = scalar_select %p163, %s162, 0
    %p165 = scmp.lt.s32.totalorder %s164, 7
    %s166 = scalar_select %p165, %s164, 7
    %s167 = scalar_lea.vmem [#allocation8], %s166
    %v168 = vld [vmem:[%s167] sm:$0x1]
    %s169 = sld [smem:[#allocation7 + $0x81]]
    %v170 = vstv %s169
    %v171 = vmul.f32 %v170, %v168
    %v172 = vadd.f32 %v160, %v171
    %s173 = sadd.f32 %s161, %s169
    %s174 = sld [smem:[#allocation2 + $0x82]]
    %p175 = scmp.gt.s32.totalorder %s174, 0
    %s176 = scalar_select %p175, %s174, 0
    %p177 = scmp.lt.s32.totalorder %s176, 7
    %s178 = scalar_select %p177, %s176, 7
    %s179 = scalar_lea.vmem [#allocation8], %s178
    %v180 = vld [vmem:[%s179] sm:$0x1]
    %s181 = sld [smem:[#allocation7 + $0x82]]
    %v182 = vstv %s181
    %v183 = vmul.f32 %v182, %v180
    %v184 = vadd.f32 %v172, %v183
    %s185 = sadd.f32 %s173, %s181
    %s186 = sld [smem:[#allocation2 + $0x83]]
    %p187 = scmp.gt.s32.totalorder %s186, 0
    %s188 = scalar_select %p187, %s186, 0
    %p189 = scmp.lt.s32.totalorder %s188, 7
    %s190 = scalar_select %p189, %s188, 7
    %s191 = scalar_lea.vmem [#allocation8], %s190
    %v192 = vld [vmem:[%s191] sm:$0x1]
    %s193 = sld [smem:[#allocation7 + $0x83]]
    %v194 = vstv %s193
    %v195 = vmul.f32 %v194, %v192
    %v196 = vadd.f32 %v184, %v195
    %s197 = sadd.f32 %s185, %s193
    %s198 = sld [smem:[#allocation2 + $0x84]]
    %p199 = scmp.gt.s32.totalorder %s198, 0
    %s200 = scalar_select %p199, %s198, 0
    %p201 = scmp.lt.s32.totalorder %s200, 7
    %s202 = scalar_select %p201, %s200, 7
    %s203 = scalar_lea.vmem [#allocation8], %s202
    %v204 = vld [vmem:[%s203] sm:$0x1]
    %s205 = sld [smem:[#allocation7 + $0x84]]
    %v206 = vstv %s205
    %v207 = vmul.f32 %v206, %v204
    %v208 = vadd.f32 %v196, %v207
    %s209 = sadd.f32 %s197, %s205
    %s210 = sld [smem:[#allocation2 + $0x85]]
    %p211 = scmp.gt.s32.totalorder %s210, 0
    %s212 = scalar_select %p211, %s210, 0
    %p213 = scmp.lt.s32.totalorder %s212, 7
    %s214 = scalar_select %p213, %s212, 7
    %s215 = scalar_lea.vmem [#allocation8], %s214
    %v216 = vld [vmem:[%s215] sm:$0x1]
    %s217 = sld [smem:[#allocation7 + $0x85]]
    %v218 = vstv %s217
    %v219 = vmul.f32 %v218, %v216
    %v220 = vadd.f32 %v208, %v219
    %s221 = sadd.f32 %s209, %s217
    %s222 = sld [smem:[#allocation2 + $0x86]]
    %p223 = scmp.gt.s32.totalorder %s222, 0
    %s224 = scalar_select %p223, %s222, 0
    %p225 = scmp.lt.s32.totalorder %s224, 7
    %s226 = scalar_select %p225, %s224, 7
    %s227 = scalar_lea.vmem [#allocation8], %s226
    %v228 = vld [vmem:[%s227] sm:$0x1]
    %s229 = sld [smem:[#allocation7 + $0x86]]
    %v230 = vstv %s229
    %v231 = vmul.f32 %v230, %v228
    %v232 = vadd.f32 %v220, %v231
    %s233 = sadd.f32 %s221, %s229
    %s234 = sld [smem:[#allocation2 + $0x87]]
    %p235 = scmp.gt.s32.totalorder %s234, 0
    %s236 = scalar_select %p235, %s234, 0
    %p237 = scmp.lt.s32.totalorder %s236, 7
    %s238 = scalar_select %p237, %s236, 7
    %s239 = scalar_lea.vmem [#allocation8], %s238
    %v240 = vld [vmem:[%s239] sm:$0x1]
    %s241 = sld [smem:[#allocation7 + $0x87]]
    %v242 = vstv %s241
    %v243 = vmul.f32 %v242, %v240
    %v244 = vadd.f32 %v232, %v243
    %s245 = sadd.f32 %s233, %s241
    %s246 = sadd.f32 %s245, 1e-09
    %v247 = vstv %s246
    %v248 = vrcp.pop %v247
    %v249 = vmul.f32 %v244, %v248
    %v251 = vrot.slane %v249, 7
    %vm253 = vcmask 1040384
    %v254 = vsel %vm253, %v149, %v251
    %255 = vst [vmem:[#allocation9] sm:$0x3] %v254
    // Predicated region
    $region26: #{tpu_custom_call.1} parent=1 // pred_check
      _
    $region27: #{tpu_custom_call.1} parent=1 // pred_check_branch
      %257 = sbr.rel (0) target = $region29
    $region28: #{tpu_custom_call.1} parent=1 // pred_region
      %s259 = ssub.s32 32, 32
      %260 = vsyncadd [#allocation4], %s259
      %s262 = sshll.u32 [#allocation9], 4
      %s263 = int_to_ptr.vmem [resolvable:$true] %s262
      %265 = dma.vmem_to_hbm [thread:$0]  %s263, 32, %s3, [#allocation4]
    $region29: #{tpu_custom_call.1} parent=1 // pred_fallthru
      _
    // Predicated region
    $region30: #{tpu_custom_call.1} parent=1 // pred_check
      _
    $region31: #{tpu_custom_call.1} parent=1 // pred_check_branch
      %267 = sbr.rel (0) target = $region33
    $region32: #{tpu_custom_call.1} parent=1 // pred_region
      %268 = dma.done [#allocation4], 32
    $region33: #{tpu_custom_call.1} parent=1 // pred_fallthru
      _
    %269 = vsyncpa [#allocation3], 1
    %270 = vsyncpa [#allocation4], 1
    %271 = vsyncpa [#allocation5], 1
    %272 = vsyncpa [#allocation6], 1

</llo_original>
